<compile_context>
chip_gen: v5e
topology: v5e:2x2
jax: 0.10.0
libtpu: 0.0.40
codegen_flags: <defaults>
</compile_context>

<pallas_src>
import jax
import jax.numpy as jnp
from jax.experimental import pallas as pl
from jax.experimental.pallas import tpu as pltpu


def to_3tuple(v):
    if isinstance(v, (tuple, list)):
        assert len(v) == 3
        return tuple(v)
    return (v, v, v)


def _round_up(x, m):
    return ((x + m - 1) // m) * m


# ----------------------------- Pallas kernel -------------------------------- #

def _patch_proj_kernel(a_ref, w_ref, b_ref, o_ref):
    # a_ref: (tm, K) bf16 patch rows, w_ref: (K, E_pad) bf16, b_ref: (1, E_pad) f32
    acc = jnp.dot(a_ref[...], w_ref[...], preferred_element_type=jnp.float32)
    o_ref[...] = (acc + b_ref[...]).astype(o_ref.dtype)


def _choose_tm(M, K, E_pad, in_bytes, out_bytes,
               vmem_budget_bytes=12 * 1024 * 1024, tm_max=4096):
    """Row tile from a VMEM budget for the double-buffered streamed blocks."""
    denom = 2 * (K * in_bytes + E_pad * out_bytes)        # 2 bufs of in + out block
    tm = max(8, min(tm_max, vmem_budget_bytes // denom))
    tm = min(tm, M)
    if M >= 16:
        # At least 2 grid steps so the "parallel" axis shards across both
        # TensorCores on v7x (single TC on v5e/v6e, so no cost there).
        tm = min(tm, _round_up(-(-M // 2), 8))
    if tm >= 8:
        tm -= tm % 8                                       # sublane-aligned row tile
    else:
        tm = M                                             # tiny M: full-dim block is legal
    return max(tm, 1)


def patch_projection(patches, weight2d, bias, *, out_dtype=jnp.float32):
    """patches: (M, K), weight2d: (K, E), bias: (E,) -> (M, E_pad); caller slices E."""
    M, K = patches.shape
    E = weight2d.shape[1]

    # Lane-dense output: pad E up to a multiple of 128 so writeback is unmasked vst.
    E_pad = _round_up(E, 128)
    if E_pad != E:
        weight2d = jnp.pad(weight2d, ((0, 0), (0, E_pad - E)))
        bias = jnp.pad(bias, ((0, E_pad - E),))
    bias2d = bias.reshape(1, E_pad).astype(jnp.float32)

    in_bytes = patches.dtype.itemsize
    out_bytes = jnp.dtype(out_dtype).itemsize
    tm = _choose_tm(M, K, E_pad, in_bytes, out_bytes)
    grid = (pl.cdiv(M, tm),)   # ragged last block handled by Pallas masking (no M pad)

    cost = pl.CostEstimate(
        flops=2 * M * K * E_pad,
        transcendentals=0,
        bytes_accessed=in_bytes * (M * K + K * E_pad) + out_bytes * M * E_pad,
    )

    out = pl.pallas_call(
        _patch_proj_kernel,
        out_shape=jax.ShapeDtypeStruct((M, E_pad), out_dtype),
        grid_spec=pltpu.PrefetchScalarGridSpec(
            num_scalar_prefetch=0,
            grid=grid,
            in_specs=[
                pl.BlockSpec((tm, K), lambda i: (i, 0)),      # patch rows (streamed)
                pl.BlockSpec((K, E_pad), lambda i: (0, 0)),   # weight (resident)
                pl.BlockSpec((1, E_pad), lambda i: (0, 0)),   # bias (resident)
            ],
            out_specs=pl.BlockSpec((tm, E_pad), lambda i: (i, 0)),
        ),
        compiler_params=pltpu.CompilerParams(
            dimension_semantics=("parallel",),
            # v5e's scoped-VMEM default is only 16 MiB; raise explicitly so the
            # budget-derived tile keeps its pipelining on every generation
            # (32 MiB is already the default on v6e/v7x and fits v7x's 64 MiB).
            vmem_limit_bytes=32 * 1024 * 1024,
        ),
        cost_estimate=cost,
    )(patches, weight2d, bias2d)

    return out   # (M, E_pad); column unpad is folded into the caller's reshape/transpose


# ----------------------------- PatchEmbed module ---------------------------- #

class PatchEmbedPallas:
    def __init__(self, img_size, patch_size=4, in_chans=3, embed_dim=96,
                 norm_layer=None, *, key=None, compute_dtype=jnp.bfloat16):
        patch_size = to_3tuple(patch_size)
        img_size = to_3tuple(img_size)
        self.patch_size = patch_size
        self.patches_resolution = [img_size[0] // patch_size[0],
                                   img_size[1] // patch_size[1],
                                   img_size[2] // patch_size[2]]
        self.in_chans = in_chans
        self.embed_dim = embed_dim
        self.compute_dtype = compute_dtype
        assert norm_layer is None  # module default

        if key is None:
            key = jax.random.PRNGKey(0)
        kw, kb = jax.random.split(key)
        fan_in = in_chans * patch_size[0] * patch_size[1] * patch_size[2]
        bound = 1.0 / jnp.sqrt(fan_in)
        # Conv3d weight shape: (embed_dim, in_chans, pH, pW, pT); bias: (embed_dim,)
        self.weight = jax.random.uniform(
            kw, (embed_dim, in_chans, *patch_size), jnp.float32, -bound, bound)
        self.bias = jax.random.uniform(
            kb, (embed_dim,), jnp.float32, -bound, bound)

    def __call__(self, x, *, channels_last=False):
        # x: (N, C, H, W, T)  -- PyTorch Conv3d layout
        N, C, H, W, T = x.shape
        pH, pW, pT = self.patch_size

        # bf16 operands (f32 accumulate in-kernel): MXU-native and halves HBM bytes
        # for the gather pass and the kernel's streamed input.
        x = x.astype(self.compute_dtype)

        # pad trailing dims up to a multiple of patch size (zeros, like F.pad)
        padT = (-T) % pT
        padW = (-W) % pW
        padH = (-H) % pH
        if padT or padW or padH:
            x = jnp.pad(x, ((0, 0), (0, 0), (0, padH), (0, padW), (0, padT)))
        H, W, T = H + padH, W + padW, T + padT
        Hh, Ww, Tt = H // pH, W // pW, T // pT

        # extract non-overlapping patches -> rows of (C*pH*pW*pT)
        # TODO(synk): fuse this gather into the kernel (strided DMA); see header note.
        xp = x.reshape(N, C, Hh, pH, Ww, pW, Tt, pT)
        xp = xp.transpose(0, 2, 4, 6, 1, 3, 5, 7)          # (N, Hh, Ww, Tt, C, pH, pW, pT)
        K = C * pH * pW * pT
        patches = xp.reshape(N * Hh * Ww * Tt, K)

        w2d = self.weight.reshape(self.embed_dim, K).T.astype(self.compute_dtype)  # (K, E)

        out_flat = patch_projection(patches, w2d, self.bias,
                                    out_dtype=jnp.float32)   # (M, E_pad)

        # Fold the E-unpad slice into the reshape/transpose so XLA emits one pass.
        out = out_flat[:, :self.embed_dim].reshape(N, Hh, Ww, Tt, self.embed_dim)
        if channels_last:
            return out                        # (N, Hh, Ww, Tt, E): skips one HBM pass
        return out.transpose(0, 4, 1, 2, 3)   # (N, E, Hh, Ww, Tt): PyTorch layout


# ----------------------------------- main ----------------------------------- #

if __name__ == "__main__":
    key = jax.random.PRNGKey(0)
    k_x, k_p = jax.random.split(key)

    N, C = 2, 4
    H, W, T = 16, 16, 7        # T=7 exercises the padding path (pads to 8)
    patch = 4
    embed_dim = 32

    x = jax.random.normal(k_x, (N, C, H, W, T), jnp.float32)

    mod = PatchEmbedPallas(img_size=(16, 16, 8), patch_size=patch,
                           in_chans=C, embed_dim=embed_dim, key=k_p)

    out = mod(x)
    out = jax.block_until_ready(out)

    # reference check: strided Conv3d via lax.conv_general_dilated on the zero-padded input
    padT = (-T) % patch
    x_pad = jnp.pad(x, ((0, 0), (0, 0), (0, 0), (0, 0), (0, padT)))
    ref = jax.lax.conv_general_dilated(
        x_pad, mod.weight,
        window_strides=(patch, patch, patch),
        padding="VALID",
        dimension_numbers=("NCHWT", "OIHWT", "NCHWT"))
    ref = ref + mod.bias[None, :, None, None, None]

    Hh, Ww, Tt = H // patch, W // patch, (T + padT) // patch
    assert out.shape == (N, embed_dim, Hh, Ww, Tt), out.shape
    err = float(jnp.max(jnp.abs(out - ref)))
    assert jnp.allclose(out, ref, atol=2e-2, rtol=2e-2), err

    print("KERNEL_OK")
</pallas_src>

<mosaic_0001>
module attributes {stable_mosaic.version = 11 : i64} {
  func.func @_patch_proj_kernel(%arg0: i32, %arg1: memref<32x256xbf16, #tpu.memory_space<vmem>>, %arg2: memref<256x128xbf16, #tpu.memory_space<vmem>>, %arg3: memref<1x128xf32, #tpu.memory_space<vmem>>, %arg4: memref<32x128xf32, #tpu.memory_space<vmem>>) attributes {dimension_semantics = [#tpu.dimension_semantics<parallel>], iteration_bounds = array<i64: 2>, scalar_prefetch = 0 : i64, scratch_operands = 0 : i64, tpu.core_type = #tpu.core_type<tc>, window_params = [{transform_indices = @transform_0, window_bounds = array<i64: 32, 256>}, {pipeline_mode = #tpu.pipeline_mode<synchronous>, transform_indices = @transform_1, window_bounds = array<i64: 256, 128>}, {pipeline_mode = #tpu.pipeline_mode<synchronous>, transform_indices = @transform_2, window_bounds = array<i64: 1, 128>}, {transform_indices = @transform_3, window_bounds = array<i64: 32, 128>}]} {
    %c0 = arith.constant 0 : index
    %c0_0 = arith.constant 0 : index
    %0 = vector.load %arg1[%c0, %c0_0] : memref<32x256xbf16, #tpu.memory_space<vmem>>, vector<32x256xbf16>
    %c0_1 = arith.constant 0 : index
    %c0_2 = arith.constant 0 : index
    %1 = vector.load %arg2[%c0_1, %c0_2] : memref<256x128xbf16, #tpu.memory_space<vmem>>, vector<256x128xbf16>
    %cst = arith.constant dense<0.000000e+00> : vector<32x128xf32>
    %2 = tpu.matmul %0, %1, %cst {dimension_numbers = #tpu.dot_dimension_numbers<[1], [0], [0], [1], [0, 0, 1, 1], [], []>} : vector<32x256xbf16>, vector<256x128xbf16>, vector<32x128xf32> -> vector<32x128xf32>
    %c0_3 = arith.constant 0 : index
    %c0_4 = arith.constant 0 : index
    %3 = vector.load %arg3[%c0_3, %c0_4] : memref<1x128xf32, #tpu.memory_space<vmem>>, vector<1x128xf32>
    %4 = vector.broadcast %3 : vector<1x128xf32> to vector<32x128xf32>
    %5 = arith.addf %2, %4 : vector<32x128xf32>
    %c0_5 = arith.constant 0 : index
    %c0_6 = arith.constant 0 : index
    %6 = vector.load %arg4[%c0_5, %c0_6] : memref<32x128xf32, #tpu.memory_space<vmem>>, vector<32x128xf32>
    tpu.vector_store %arg4[%c0_5, %c0_6], %5 {strides = array<i32>} : memref<32x128xf32, #tpu.memory_space<vmem>>, vector<32x128xf32>,
    return
  }
  func.func @transform_0(%arg0: i32) -> (i32, i32) {
    %c0_i32 = arith.constant 0 : i32
    %c0_i32_0 = arith.constant 0 : i32
    return %arg0, %c0_i32 : i32, i32
  }
  func.func @transform_1(%arg0: i32) -> (i32, i32) {
    %c0_i32 = arith.constant 0 : i32
    %c0_i32_0 = arith.constant 0 : i32
    %c0_i32_1 = arith.constant 0 : i32
    return %c0_i32, %c0_i32_0 : i32, i32
  }
  func.func @transform_2(%arg0: i32) -> (i32, i32) {
    %c0_i32 = arith.constant 0 : i32
    %c0_i32_0 = arith.constant 0 : i32
    %c0_i32_1 = arith.constant 0 : i32
    return %c0_i32, %c0_i32_0 : i32, i32
  }
  func.func @transform_3(%arg0: i32) -> (i32, i32) {
    %c0_i32 = arith.constant 0 : i32
    %c0_i32_0 = arith.constant 0 : i32
    return %arg0, %c0_i32 : i32, i32
  }
}

</mosaic_0001>

<llo_original>
// kernel: tpu_custom_call.1
$region0: #{tpu_custom_call.1}
  #allocation0 [shape = 'u32[]', space=smem, size = 0x4, offset = 0x4, fixed_abs, tag = 'smem constant byte address 0x4 - core index']
  #allocation1 [shape = 'u32[72,128]{1,0:T(1,128)}', space=vmem, size = 0x9000, scoped, tag = 'internal scratch']
  %s0 = inlined_call_operand.hbm [shape: bf16[64,256], index: 0, kind: input, shape index: {}]
  %s1 = inlined_call_operand.hbm [shape: bf16[256,128], index: 1, kind: input, shape index: {}]
  %s2 = inlined_call_operand.vmem [shape: f32[1,128], index: 2, kind: input, shape index: {}]
  %s3 = inlined_call_operand.hbm [shape: f32[64,128], index: 3, kind: output, shape index: {}]
  %s4 = sld [smem:[#allocation0]]
  $region53: #{tpu_custom_call.1} parent=0
    _
  %s6 = ssub.s32 1, %s4
  %s7 = scalar_select 0, %s6, %s4
  $region1: #{tpu_custom_call.1} parent=0
    #allocation2 [shape = 'u8[32768]{0}', space=vmem, size = 0x8000, scoped, tag = 'input window, operand 0']
    #allocation3 [shape = 's32[2]{0}', space=sflag, size = 0x8, scoped, tag = 'scoped memory for tpu_custom_call.1']
    #allocation4 [shape = 's32[2]{0}', space=sflag, size = 0x8, scoped, tag = 'scoped memory for tpu_custom_call.1']
    #allocation5 [shape = 'u8[65536]{0}', space=vmem, size = 0x10000, scoped, tag = 'input window, operand 1, single buffered']
    #allocation6 [shape = 's32[1]{0}', space=sflag, size = 0x4, scoped, tag = 'scoped memory for tpu_custom_call.1']
    #allocation7 [shape = 'u8[32768]{0}', space=vmem, size = 0x8000, scoped, tag = 'output window, operand 0']
    %8 = vsyncpa [#allocation3], 0
    %s9 = scalar_lea.sflag [#allocation3], 1
    %10 = vsyncpa %s9, 0
    %11 = vsyncpa [#allocation6], 0
    %12 = vsyncpa [#allocation4], 0
    %s13 = scalar_lea.sflag [#allocation4], 1
    %14 = vsyncpa %s13, 0
    loop: start=0, step=1, limit=4
    $region2: #{tpu_custom_call.1} parent=1 // loop_pre_header
      _
    $region3: #{tpu_custom_call.1} parent=1 // loop_header
      %s16 = sphi 0, %s20
      %p17 = scmp.ge.s32.totalorder %s16, 4
      %s26 = sphi 0, %s28
      %s29 = sphi 0, %s26
      %s30 = sphi 0, %s29
      %s46 = sphi 0, %s30
      %s50 = sphi 0, %s50
      %s52 = sphi 0, %s50
      %s53 = sphi 0, %s52
      %s67 = sphi 0, %s53
      %s71 = sphi 0, %s71
      %s73 = sphi 0, %s71
      %s74 = sphi 0, %s73
      %s88 = sphi 0, %s74
      %s94 = sphi 0, %s96
      %s97 = sphi 0, %s94
      %s98 = sphi 0, %s97
      %s114 = sphi 0, %s98
    $region4: #{tpu_custom_call.1} parent=1 // loop_header_branch
      %19 = sbr.rel (%p17) target = $region8
    $region5: #{tpu_custom_call.1} parent=1 // loop_body
      %s21 = ssub.s32 %s16, 1
      %s22 = ssub.s32 %s16, 2
      %s23 = sadd.s32 %s16, 1
      %s24 = ssub.s32 %s16, %s23
      %p25 = scmp.eq.s32.totalorder %s24, 0
      %s27 = sadd.s32 %s26, 1
      %s28 = scalar_select %p25, %s26, %s27
      %p31 = pneg %p25
      %p32 = scmp.eq.s32.totalorder %s16, 1
      %p33 = por %p31, %p32
      %p34 = scmp.ne.s32.totalorder %s26, %s29
      %p35 = scmp.eq.s32.totalorder %s16, 0
      %p36 = por %p34, %p35
      %p37 = scmp.ne.s32.totalorder %s26, %s29
      %p38 = scmp.eq.s32.totalorder %s21, 1
      %p39 = por %p37, %p38
      %p40 = scmp.ne.s32.totalorder %s29, %s30
      %p41 = scmp.eq.s32.totalorder %s21, 0
      %p42 = por %p40, %p41
      %p43 = scmp.ne.s32.totalorder %s29, %s30
      %p44 = scmp.eq.s32.totalorder %s22, 1
      %p45 = por %p43, %p44
      %p47 = scmp.ne.s32.totalorder %s30, %s46
      %p48 = scmp.eq.s32.totalorder %s22, 0
      %p49 = por %p47, %p48
      %s51 = sadd.s32 %s50, 1
      %p54 = scmp.eq.s32.totalorder %s16, 1
      %p55 = scmp.ne.s32.totalorder %s50, %s52
      %p56 = scmp.eq.s32.totalorder %s16, 0
      %p57 = por %p55, %p56
      %p58 = scmp.ne.s32.totalorder %s50, %s52
      %p59 = scmp.eq.s32.totalorder %s21, 1
      %p60 = por %p58, %p59
      %p61 = scmp.ne.s32.totalorder %s52, %s53
      %p62 = scmp.eq.s32.totalorder %s21, 0
      %p63 = por %p61, %p62
      %p64 = scmp.ne.s32.totalorder %s52, %s53
      %p65 = scmp.eq.s32.totalorder %s22, 1
      %p66 = por %p64, %p65
      %p68 = scmp.ne.s32.totalorder %s53, %s67
      %p69 = scmp.eq.s32.totalorder %s22, 0
      %p70 = por %p68, %p69
      %s72 = sadd.s32 %s71, 1
      %p75 = scmp.eq.s32.totalorder %s16, 1
      %p76 = scmp.ne.s32.totalorder %s71, %s73
      %p77 = scmp.eq.s32.totalorder %s16, 0
      %p78 = por %p76, %p77
      %p79 = scmp.ne.s32.totalorder %s71, %s73
      %p80 = scmp.eq.s32.totalorder %s21, 1
      %p81 = por %p79, %p80
      %p82 = scmp.ne.s32.totalorder %s73, %s74
      %p83 = scmp.eq.s32.totalorder %s21, 0
      %p84 = por %p82, %p83
      %p85 = scmp.ne.s32.totalorder %s73, %s74
      %p86 = scmp.eq.s32.totalorder %s22, 1
      %p87 = por %p85, %p86
      %p89 = scmp.ne.s32.totalorder %s74, %s88
      %p90 = scmp.eq.s32.totalorder %s22, 0
      %p91 = por %p89, %p90
      %s92 = ssub.s32 %s16, %s23
      %p93 = scmp.eq.s32.totalorder %s92, 0
      %s95 = sadd.s32 %s94, 1
      %s96 = scalar_select %p93, %s94, %s95
      %p99 = pneg %p93
      %p100 = scmp.eq.s32.totalorder %s16, 1
      %p101 = por %p99, %p100
      %p102 = scmp.ne.s32.totalorder %s94, %s97
      %p103 = scmp.eq.s32.totalorder %s16, 0
      %p104 = por %p102, %p103
      %p105 = scmp.ne.s32.totalorder %s94, %s97
      %p106 = scmp.eq.s32.totalorder %s21, 1
      %p107 = por %p105, %p106
      %p108 = scmp.ne.s32.totalorder %s97, %s98
      %p109 = scmp.eq.s32.totalorder %s21, 0
      %p110 = por %p108, %p109
      %p111 = scmp.ne.s32.totalorder %s97, %s98
      %p112 = scmp.eq.s32.totalorder %s22, 1
      %p113 = por %p111, %p112
      %p115 = scmp.ne.s32.totalorder %s98, %s114
      %p116 = scmp.eq.s32.totalorder %s22, 0
      %p117 = por %p115, %p116
      %p118 = scmp.le.s32.totalorder 1, %s16
      %p119 = scmp.lt.s32.totalorder %s16, 3
      %p120 = pnand %p118, %p119
      %p121 = pneg %p120
      // Predicated region
      $region9: #{tpu_custom_call.1} parent=5 // pred_check
        _
      $region10: #{tpu_custom_call.1} parent=5 // pred_check_branch
        %123 = sbr.rel (%p120) target = $region12
      $region11: #{tpu_custom_call.1} parent=5 // pred_region
        %s124 = ssub.s32 %s16, 1
        // Predicated region
        $region13: #{tpu_custom_call.1} parent=11 // pred_check
          %p125 = pneg %p63
        $region14: #{tpu_custom_call.1} parent=11 // pred_check_branch
          %127 = sbr.rel (%p125) target = $region16
        $region15: #{tpu_custom_call.1} parent=11 // pred_region
          %129 = vsyncadd [#allocation6], 0
          %s130 = sshll.u32 %s1, 4
          %s131 = int_to_ptr.hbm [resolvable:$true] %s130
          %s132 = sshll.u32 [#allocation5], 4
          %s133 = int_to_ptr.vmem [resolvable:$true] %s132
          %138 = dma.hbm_to_vmem [thread:$0]  %s131, 2048, %s133, [#allocation6], 64, 64, 4
        $region16: #{tpu_custom_call.1} parent=11 // pred_fallthru
          _
        // Predicated region
        $region17: #{tpu_custom_call.1} parent=11 // pred_check
          %p139 = pneg %p84
        $region18: #{tpu_custom_call.1} parent=11 // pred_check_branch
          %141 = sbr.rel (%p139) target = $region20
        $region19: #{tpu_custom_call.1} parent=11 // pred_region
          _
        $region20: #{tpu_custom_call.1} parent=11 // pred_fallthru
          _
      $region12: #{tpu_custom_call.1} parent=5 // pred_fallthru
        _
      %p142 = scmp.lt.s32.totalorder %s16, 2
      // Predicated region
      $region21: #{tpu_custom_call.1} parent=5 // pred_check
        %p143 = pneg %p142
      $region22: #{tpu_custom_call.1} parent=5 // pred_check_branch
        %145 = sbr.rel (%p143) target = $region24
      $region23: #{tpu_custom_call.1} parent=5 // pred_region
        // Predicated region
        $region25: #{tpu_custom_call.1} parent=23 // pred_check
          %p146 = pneg %p36
        $region26: #{tpu_custom_call.1} parent=23 // pred_check_branch
          %148 = sbr.rel (%p146) target = $region28
        $region27: #{tpu_custom_call.1} parent=23 // pred_region
          %s149 = sand.u32 %s26, 1
          %s150 = scalar_lea.sflag [#allocation3], %s149
          %s151 = sand.u32 %s26, 1
          %s152 = smul.addr %s151, 32
          %s153 = scalar_lea.vmem [#allocation2], %s152
          %s154 = smul.u32 4, %s16
          %156 = vsyncadd %s150, 0
          %s157 = smul.addr %s154, 2
          %s158 = smul.addr %s157, 4
          %s159 = scalar_lea.hbm %s0, %s158
          %s160 = sshll.u32 %s159, 4
          %s161 = int_to_ptr.hbm [resolvable:$true] %s160
          %s162 = sshll.u32 %s153, 4
          %s163 = int_to_ptr.vmem [resolvable:$true] %s162
          %168 = dma.hbm_to_vmem [thread:$0]  %s161, 512, %s163, %s150, 128, 128, 8
        $region28: #{tpu_custom_call.1} parent=23 // pred_fallthru
          _
      $region24: #{tpu_custom_call.1} parent=5 // pred_fallthru
        _
      %p169 = scmp.le.s32.totalorder 1, %s16
      %p170 = scmp.lt.s32.totalorder %s16, 3
      %p171 = pnand %p169, %p170
      %p172 = pneg %p171
      // Predicated region
      $region29: #{tpu_custom_call.1} parent=5 // pred_check
        _
      $region30: #{tpu_custom_call.1} parent=5 // pred_check_branch
        %174 = sbr.rel (%p171) target = $region32
      $region31: #{tpu_custom_call.1} parent=5 // pred_region
        %s175 = ssub.s32 %s16, 1
        %s176 = sand.u32 %s29, 1
        %s177 = scalar_lea.sflag [#allocation3], %s176
        %s178 = sand.u32 %s29, 1
        %s179 = smul.addr %s178, 32
        %s180 = scalar_lea.vmem [#allocation2], %s179
        // Predicated region
        $region33: #{tpu_custom_call.1} parent=31 // pred_check
          %p181 = pneg %p42
        $region34: #{tpu_custom_call.1} parent=31 // pred_check_branch
          %183 = sbr.rel (%p181) target = $region36
        $region35: #{tpu_custom_call.1} parent=31 // pred_region
          %185 = dma.done %s177, 512
        $region36: #{tpu_custom_call.1} parent=31 // pred_fallthru
          _
        // Predicated region
        $region37: #{tpu_custom_call.1} parent=31 // pred_check
          %p186 = pneg %p63
        $region38: #{tpu_custom_call.1} parent=31 // pred_check_branch
          %188 = sbr.rel (%p186) target = $region40
        $region39: #{tpu_custom_call.1} parent=31 // pred_region
          %190 = dma.done [#allocation6], 2048
        $region40: #{tpu_custom_call.1} parent=31 // pred_fallthru
          _
        %s191 = sand.u32 %s29, 1
        %s192 = scalar_lea.sflag [#allocation3], %s191
        %s193 = sand.u32 %s29, 1
        %s194 = smul.addr %s193, 32
        %s195 = scalar_lea.vmem [#allocation2], %s194
        %p196 = pneg %p42
        %p197 = pneg %p39
        %p198 = pneg %p63
        %p199 = pneg %p60
        %p200 = pneg %p84
        %p201 = pneg %p81
        %p202 = pneg %p110
        %p203 = pneg %p107
        %s204 = sand.u32 %s97, 1
        %s205 = scalar_lea.sflag [#allocation4], %s204
        %s206 = sand.u32 %s97, 1
        %s207 = smul.addr %s206, 32
        %s208 = scalar_lea.vmem [#allocation7], %s207
        %s209 = smul.u32 4, %s21
        %s210 = smul.u32 4, %s21
        %v211 = vld [vmem:[%s180] sm:$0xff]
        %v212 = vld [vmem:[%s180 + $0x8] sm:$0xff]
        %v213 = vld [vmem:[%s180 + $0x10] sm:$0xff]
        %v214 = vld [vmem:[%s180 + $0x18] sm:$0xff]
        %v215 = vld [vmem:[#allocation5] sm:$0xf]
        %v216 = vld [vmem:[#allocation5 + $0x4] sm:$0xf]
        %v217 = vld [vmem:[#allocation5 + $0x8] sm:$0xf]
        %v218 = vld [vmem:[#allocation5 + $0xc] sm:$0xf]
        %v219 = vld [vmem:[#allocation5 + $0x10] sm:$0xf]
        %v220 = vld [vmem:[#allocation5 + $0x14] sm:$0xf]
        %v221 = vld [vmem:[#allocation5 + $0x18] sm:$0xf]
        %v222 = vld [vmem:[#allocation5 + $0x1c] sm:$0xf]
        %v223 = vld [vmem:[#allocation5 + $0x20] sm:$0xf]
        %v224 = vld [vmem:[#allocation5 + $0x24] sm:$0xf]
        %v225 = vld [vmem:[#allocation5 + $0x28] sm:$0xf]
        %v226 = vld [vmem:[#allocation5 + $0x2c] sm:$0xf]
        %v227 = vld [vmem:[#allocation5 + $0x30] sm:$0xf]
        %v228 = vld [vmem:[#allocation5 + $0x34] sm:$0xf]
        %v229 = vld [vmem:[#allocation5 + $0x38] sm:$0xf]
        %v230 = vld [vmem:[#allocation5 + $0x3c] sm:$0xf]
        %v231 = vld [vmem:[#allocation5 + $0x40] sm:$0xf]
        %v232 = vld [vmem:[#allocation5 + $0x44] sm:$0xf]
        %v233 = vld [vmem:[#allocation5 + $0x48] sm:$0xf]
        %v234 = vld [vmem:[#allocation5 + $0x4c] sm:$0xf]
        %v235 = vld [vmem:[#allocation5 + $0x50] sm:$0xf]
        %v236 = vld [vmem:[#allocation5 + $0x54] sm:$0xf]
        %v237 = vld [vmem:[#allocation5 + $0x58] sm:$0xf]
        %v238 = vld [vmem:[#allocation5 + $0x5c] sm:$0xf]
        %v239 = vld [vmem:[#allocation5 + $0x60] sm:$0xf]
        %v240 = vld [vmem:[#allocation5 + $0x64] sm:$0xf]
        %v241 = vld [vmem:[#allocation5 + $0x68] sm:$0xf]
        %v242 = vld [vmem:[#allocation5 + $0x6c] sm:$0xf]
        %v243 = vld [vmem:[#allocation5 + $0x70] sm:$0xf]
        %v244 = vld [vmem:[#allocation5 + $0x74] sm:$0xf]
        %v245 = vld [vmem:[#allocation5 + $0x78] sm:$0xf]
        %v246 = vld [vmem:[#allocation5 + $0x7c] sm:$0xf]
        %v247 = vld [vmem:[%s2] sm:$0x1]
        %v249 = vperm.slane %v247, 0
        %v255 = vunpack.c.l.b16 %v211
        %v256 = vunpack.c.h.b16 %v211
        %v257 = vunpack.c.l.b16 %v212
        %v258 = vunpack.c.h.b16 %v212
        %v259 = vunpack.c.l.b16 %v213
        %v260 = vunpack.c.h.b16 %v213
        %v261 = vunpack.c.l.b16 %v214
        %v262 = vunpack.c.h.b16 %v214
        %v263 = vpack.c.b16 %v257, %v255
        %v264 = vpack.c.b16 %v258, %v256
        %v265 = vpack.c.b16 %v261, %v259
        %v266 = vpack.c.b16 %v262, %v260
        %v303 = vunpack.c.l.b16 %v215
        %v304 = vunpack.c.l.b16 %v216
        %v305 = vunpack.c.l.b16 %v217
        %v306 = vunpack.c.l.b16 %v218
        %v307 = vunpack.c.l.b16 %v219
        %v308 = vunpack.c.l.b16 %v220
        %v309 = vunpack.c.l.b16 %v221
        %v310 = vunpack.c.l.b16 %v222
        %v311 = vunpack.c.l.b16 %v223
        %v312 = vunpack.c.l.b16 %v224
        %v313 = vunpack.c.l.b16 %v225
        %v314 = vunpack.c.l.b16 %v226
        %v315 = vunpack.c.l.b16 %v227
        %v316 = vunpack.c.l.b16 %v228
        %v317 = vunpack.c.l.b16 %v229
        %v318 = vunpack.c.l.b16 %v230
        %v319 = vunpack.c.l.b16 %v231
        %v320 = vunpack.c.l.b16 %v232
        %v321 = vunpack.c.l.b16 %v233
        %v322 = vunpack.c.l.b16 %v234
        %v323 = vunpack.c.l.b16 %v235
        %v324 = vunpack.c.l.b16 %v236
        %v325 = vunpack.c.l.b16 %v237
        %v326 = vunpack.c.l.b16 %v238
        %v327 = vunpack.c.l.b16 %v239
        %v328 = vunpack.c.l.b16 %v240
        %v329 = vunpack.c.l.b16 %v241
        %v330 = vunpack.c.l.b16 %v242
        %v331 = vunpack.c.l.b16 %v243
        %v332 = vunpack.c.l.b16 %v244
        %v333 = vunpack.c.l.b16 %v245
        %v334 = vunpack.c.l.b16 %v246
        %v335 = vpack.c.b16 %v304, %v303
        %v336 = vpack.c.b16 %v306, %v305
        %v337 = vpack.c.b16 %v308, %v307
        %v338 = vpack.c.b16 %v310, %v309
        %v339 = vpack.c.b16 %v312, %v311
        %v340 = vpack.c.b16 %v314, %v313
        %v341 = vpack.c.b16 %v316, %v315
        %v342 = vpack.c.b16 %v318, %v317
        %v343 = vpack.c.b16 %v320, %v319
        %v344 = vpack.c.b16 %v322, %v321
        %v345 = vpack.c.b16 %v324, %v323
        %v346 = vpack.c.b16 %v326, %v325
        %v347 = vpack.c.b16 %v328, %v327
        %v348 = vpack.c.b16 %v330, %v329
        %v349 = vpack.c.b16 %v332, %v331
        %v350 = vpack.c.b16 %v334, %v333
        %367 = vmatpush.bf16.msra.mxu0 %v342
        %368 = vmatpush.bf16.msra.mxu0 %v341
        %369 = vmatpush.bf16.msra.mxu0 %v340
        %370 = vmatpush.bf16.msra.mxu0 %v339
        %371 = vmatpush.bf16.msra.mxu0 %v338
        %372 = vmatpush.bf16.msra.mxu0 %v337
        %373 = vmatpush.bf16.msra.mxu0 %v336
        %374 = vmatpush.bf16.msra.mxu0 %v335
        %375 = vmatmul.bf16.gmra.mxu0 %v263
        %v376 = vpop.f32.mrf.mxu0
        %v377 = vadd.f32 %v249, %v376
        %v378 = vpop.f32.mrf.mxu0
        %v379 = vadd.f32 %v249, %v378
        %380 = vmatmul.bf16.gmra.mxu0 %v265
        %v381 = vpop.f32.mrf.mxu0
        %v382 = vadd.f32 %v249, %v381
        %v383 = vpop.f32.mrf.mxu0
        %v384 = vadd.f32 %v249, %v383
        %385 = vdwg.mxu0
        %386 = vmatpush.bf16.msra.mxu0 %v350
        %387 = vmatpush.bf16.msra.mxu0 %v349
        %388 = vmatpush.bf16.msra.mxu0 %v348
        %389 = vmatpush.bf16.msra.mxu0 %v347
        %390 = vmatpush.bf16.msra.mxu0 %v346
        %391 = vmatpush.bf16.msra.mxu0 %v345
        %392 = vmatpush.bf16.msra.mxu0 %v344
        %393 = vmatpush.bf16.msra.mxu0 %v343
        %394 = vmatmul.bf16.gmra.mxu0 %v264
        %v395 = vpop.f32.mrf.mxu0
        %v396 = vadd.f32 %v377, %v395
        %v397 = vpop.f32.mrf.mxu0
        %v398 = vadd.f32 %v379, %v397
        %399 = vmatmul.bf16.gmra.mxu0 %v266
        %v400 = vpop.f32.mrf.mxu0
        %v401 = vadd.f32 %v382, %v400
        %v402 = vpop.f32.mrf.mxu0
        %v403 = vadd.f32 %v384, %v402
        %404 = vdwg.mxu0
        %405 = vst [vmem:[%s208] sm:$0xff] %v396
        %406 = vst [vmem:[%s208 + $0x8] sm:$0xff] %v398
        %407 = vst [vmem:[%s208 + $0x10] sm:$0xff] %v401
        %408 = vst [vmem:[%s208 + $0x18] sm:$0xff] %v403
        %s409 = sand.u32 %s97, 1
        %s410 = scalar_lea.sflag [#allocation4], %s409
        %s411 = sand.u32 %s97, 1
        %s412 = smul.addr %s411, 32
        %s413 = scalar_lea.vmem [#allocation7], %s412
        // Predicated region
        $region41: #{tpu_custom_call.1} parent=31 // pred_check
          %p414 = pneg %p107
        $region42: #{tpu_custom_call.1} parent=31 // pred_check_branch
          %416 = sbr.rel (%p414) target = $region44
        $region43: #{tpu_custom_call.1} parent=31 // pred_region
          %s417 = smul.u32 4, %s21
          %419 = vsyncadd %s410, 0
          %s420 = smul.addr %s417, 8
          %s421 = scalar_lea.hbm %s3, %s420
          %s422 = sshll.u32 %s413, 4
          %s423 = int_to_ptr.vmem [resolvable:$true] %s422
          %s424 = sshll.u32 %s421, 4
          %s425 = int_to_ptr.hbm [resolvable:$true] %s424
          %430 = dma.vmem_to_hbm [thread:$0]  %s423, 512, %s425, %s410, 128, 128, 8
        $region44: #{tpu_custom_call.1} parent=31 // pred_fallthru
          _
      $region32: #{tpu_custom_call.1} parent=5 // pred_fallthru
        _
      %p431 = scmp.le.s32.totalorder 2, %s16
      // Predicated region
      $region45: #{tpu_custom_call.1} parent=5 // pred_check
        %p432 = pneg %p431
      $region46: #{tpu_custom_call.1} parent=5 // pred_check_branch
        %434 = sbr.rel (%p432) target = $region48
      $region47: #{tpu_custom_call.1} parent=5 // pred_region
        %s435 = ssub.s32 %s16, 2
        // Predicated region
        $region49: #{tpu_custom_call.1} parent=47 // pred_check
          %p436 = pneg %p113
        $region50: #{tpu_custom_call.1} parent=47 // pred_check_branch
          %438 = sbr.rel (%p436) target = $region52
        $region51: #{tpu_custom_call.1} parent=47 // pred_region
          %s439 = sand.u32 %s98, 1
          %s440 = scalar_lea.sflag [#allocation4], %s439
          %s441 = sand.u32 %s98, 1
          %s442 = smul.addr %s441, 32
          %s443 = scalar_lea.vmem [#allocation7], %s442
          %445 = dma.done %s440, 512
        $region52: #{tpu_custom_call.1} parent=47 // pred_fallthru
          _
      $region48: #{tpu_custom_call.1} parent=5 // pred_fallthru
        _
    $region6: #{tpu_custom_call.1} parent=1 // loop_footer
      %s20 = sadd.s32 1, %s16
    $region7: #{tpu_custom_call.1} parent=1 // loop_footer_branch
      %15 = sbr.rel target = $region3
    $region8: #{tpu_custom_call.1} parent=1 // loop_exit
      _
    %446 = vsyncpa [#allocation3], 1
    %s447 = scalar_lea.sflag [#allocation3], 1
    %448 = vsyncpa %s447, 1
    %449 = vsyncpa [#allocation6], 1
    %450 = vsyncpa [#allocation4], 1
    %s451 = scalar_lea.sflag [#allocation4], 1
    %452 = vsyncpa %s451, 1

</llo_original>
